<compile_context>
chip_gen: v6e
topology: v6e:2x2x1
jax: 0.10.0
libtpu: 0.0.40
codegen_flags: <defaults>
</compile_context>

<pallas_src>
import jax
import jax.numpy as jnp
from jax.experimental import pallas as pl
from jax.experimental.pallas import tpu as pltpu


def mnf_kernel(z_ref, m_ref, wf_ref, bf_ref, wgk_ref, bgk_ref, out_ref):
    dim = out_ref.shape[0]

    z = z_ref[...]                                   # (dim, TB)  f32
    m = m_ref[...].astype(jnp.float32)               # (dim, TB)  mask in {0, 1}
    mz = m * z

    # Stage 1:  h = tanh(Wf @ (m*z) + bf)        (hidden, dim) @ (dim, TB) -> (hidden, TB)
    h = jnp.tanh(
        jnp.dot(wf_ref[...], mz.astype(jnp.bfloat16),
                preferred_element_type=jnp.float32)
        + bf_ref[...])

    # Stage 2 (fused g & k heads):  (2*dim, hidden) @ (hidden, TB) -> (2*dim, TB)
    ms = (jnp.dot(wgk_ref[...], h.astype(jnp.bfloat16),
                  preferred_element_type=jnp.float32)
          + bgk_ref[...])
    mu = ms[:dim, :]
    sigma = jax.nn.sigmoid(ms[dim:, :])

    # out = m*z + (1-m)*(z*sigma + (1-sigma)*mu)  ==  mz + (1-m)*(mu + sigma*(z - mu))
    out_ref[...] = mz + (1.0 - m) * (mu + sigma * (z - mu))


def mnf_forward(z, m, wf, bf, wg, bg, wk, bk, *, tb_max=512):
    """z, m: (B, dim).  Weights in PyTorch layout: wf (hidden, dim),
    wg/wk (dim, hidden); biases 1-D (out_features,)."""
    B, dim = z.shape
    hidden = wf.shape[0]

    # Lane-dense batch tile; pad batch to a multiple of the tile.
    tb = min(tb_max, ((B + 127) // 128) * 128)
    bp = ((B + tb - 1) // tb) * tb
    if bp != B:
        z = jnp.pad(z, ((0, bp - B), (0, 0)))
        m = jnp.pad(m, ((0, bp - B), (0, 0)))

    # Transpose so batch is the lane (last) axis; mask travels as bf16 (exact 0/1).
    z_t = z.T.astype(jnp.float32)                    # (dim, Bp)
    m_t = m.T.astype(jnp.bfloat16)                   # (dim, Bp)

    wf_b = wf.astype(jnp.bfloat16)                                    # (hidden, dim)
    bf_c = bf.astype(jnp.float32).reshape(hidden, 1)                  # (hidden, 1)
    wgk_b = jnp.concatenate([wg, wk], axis=0).astype(jnp.bfloat16)    # (2*dim, hidden)
    bgk_c = jnp.concatenate([bg, bk], axis=0).astype(jnp.float32).reshape(2 * dim, 1)

    out_t = pl.pallas_call(
        mnf_kernel,
        out_shape=jax.ShapeDtypeStruct((dim, bp), jnp.float32),
        grid=(bp // tb,),
        in_specs=[
            pl.BlockSpec((dim, tb), lambda i: (0, i)),          # z   (tiled over batch)
            pl.BlockSpec((dim, tb), lambda i: (0, i)),          # m   (tiled over batch)
            pl.BlockSpec((hidden, dim), lambda i: (0, 0)),      # Wf     (VMEM-resident)
            pl.BlockSpec((hidden, 1), lambda i: (0, 0)),        # bf
            pl.BlockSpec((2 * dim, hidden), lambda i: (0, 0)),  # Wg||Wk (VMEM-resident)
            pl.BlockSpec((2 * dim, 1), lambda i: (0, 0)),       # bg||bk
        ],
        out_specs=pl.BlockSpec((dim, tb), lambda i: (0, i)),
        compiler_params=pltpu.CompilerParams(
            dimension_semantics=("parallel",)),                 # megacore-shardable
    )(z_t, m_t, wf_b, bf_c, wgk_b, bgk_c)

    return out_t.T[:B]


def init_linear(key, in_features, out_features):
    """PyTorch nn.Linear init: U(-1/sqrt(fan_in), +1/sqrt(fan_in)).
    Weight in (out_features, in_features) layout, 1-D bias."""
    kw, kb = jax.random.split(key)
    bound = 1.0 / jnp.sqrt(jnp.float32(in_features))
    w = jax.random.uniform(kw, (out_features, in_features), jnp.float32, -bound, bound)
    b = jax.random.uniform(kb, (out_features,), jnp.float32, -bound, bound)
    return w, b


if __name__ == "__main__":
    B, dim, hidden = 1024, 16, 32

    key = jax.random.PRNGKey(0)
    kz, km, kf, kg, kk = jax.random.split(key, 5)

    z = jax.random.normal(kz, (B, dim), jnp.float32)
    # Bernoulli(0.5) mask, same shape as z (the module's self.m).
    m = jax.random.bernoulli(km, 0.5, (B, dim)).astype(jnp.float32)

    wf, bf = init_linear(kf, dim, hidden)
    wg, bg = init_linear(kg, hidden, dim)
    wk, bk = init_linear(kk, hidden, dim)

    out = mnf_forward(z, m, wf, bf, wg, bg, wk, bk)
    out = jax.block_until_ready(out)

    # Pure-JAX reference with the SAME bf16-operand / f32-accumulate matmuls.
    bf16 = jnp.bfloat16
    mz = m * z
    h_ref = jnp.tanh(jnp.dot(mz.astype(bf16), wf.T.astype(bf16),
                             preferred_element_type=jnp.float32) + bf)
    mu_ref = jnp.dot(h_ref.astype(bf16), wg.T.astype(bf16),
                     preferred_element_type=jnp.float32) + bg
    sigma_ref = jax.nn.sigmoid(jnp.dot(h_ref.astype(bf16), wk.T.astype(bf16),
                                       preferred_element_type=jnp.float32) + bk)
    ref = mz + (1.0 - m) * (z * sigma_ref + (1.0 - sigma_ref) * mu_ref)

    assert out.shape == (B, dim)
    err = float(jnp.max(jnp.abs(out - ref)))
    assert jnp.allclose(out, ref, atol=2e-3, rtol=2e-3), err

    # TODO(synk): log_det() = sum((1-m) * log(sigma)) is not part of forward(); it
    # could be emitted as a second tiny reduction output if needed.

    print("KERNEL_OK")
</pallas_src>

<mosaic_0001>
module attributes {stable_mosaic.version = 11 : i64} {
  func.func @mnf_kernel(%arg0: i32, %arg1: memref<16x512xf32, #tpu.memory_space<vmem>>, %arg2: memref<16x512xbf16, #tpu.memory_space<vmem>>, %arg3: memref<32x16xbf16, #tpu.memory_space<vmem>>, %arg4: memref<32x1xf32, #tpu.memory_space<vmem>>, %arg5: memref<32x32xbf16, #tpu.memory_space<vmem>>, %arg6: memref<32x1xf32, #tpu.memory_space<vmem>>, %arg7: memref<16x512xf32, #tpu.memory_space<vmem>>) attributes {dimension_semantics = [#tpu.dimension_semantics<parallel>], iteration_bounds = array<i64: 2>, scalar_prefetch = 0 : i64, scratch_operands = 0 : i64, tpu.core_type = #tpu.core_type<tc>, window_params = [{transform_indices = @transform_0, window_bounds = array<i64: 16, 512>}, {transform_indices = @transform_1, window_bounds = array<i64: 16, 512>}, {pipeline_mode = #tpu.pipeline_mode<synchronous>, transform_indices = @transform_2, window_bounds = array<i64: 32, 16>}, {pipeline_mode = #tpu.pipeline_mode<synchronous>, transform_indices = @transform_3, window_bounds = array<i64: 32, 1>}, {pipeline_mode = #tpu.pipeline_mode<synchronous>, transform_indices = @transform_4, window_bounds = array<i64: 32, 32>}, {pipeline_mode = #tpu.pipeline_mode<synchronous>, transform_indices = @transform_5, window_bounds = array<i64: 32, 1>}, {transform_indices = @transform_6, window_bounds = array<i64: 16, 512>}]} {
    %c0 = arith.constant 0 : index
    %c0_0 = arith.constant 0 : index
    %0 = vector.load %arg1[%c0, %c0_0] : memref<16x512xf32, #tpu.memory_space<vmem>>, vector<16x512xf32>
    %c0_1 = arith.constant 0 : index
    %c0_2 = arith.constant 0 : index
    %1 = vector.load %arg2[%c0_1, %c0_2] : memref<16x512xbf16, #tpu.memory_space<vmem>>, vector<16x512xbf16>
    %2 = arith.extf %1 : vector<16x512xbf16> to vector<16x512xf32>
    %3 = arith.mulf %2, %0 : vector<16x512xf32>
    %c0_3 = arith.constant 0 : index
    %c0_4 = arith.constant 0 : index
    %4 = vector.load %arg3[%c0_3, %c0_4] : memref<32x16xbf16, #tpu.memory_space<vmem>>, vector<32x16xbf16>
    %5 = arith.truncf %3 : vector<16x512xf32> to vector<16x512xbf16>
    %cst = arith.constant dense<0.000000e+00> : vector<32x512xf32>
    %6 = tpu.matmul %4, %5, %cst {dimension_numbers = #tpu.dot_dimension_numbers<[1], [0], [0], [1], [0, 0, 1, 1], [], []>} : vector<32x16xbf16>, vector<16x512xbf16>, vector<32x512xf32> -> vector<32x512xf32>
    %c0_5 = arith.constant 0 : index
    %c0_6 = arith.constant 0 : index
    %7 = vector.load %arg4[%c0_5, %c0_6] : memref<32x1xf32, #tpu.memory_space<vmem>>, vector<32x1xf32>
    %8 = vector.broadcast %7 : vector<32x1xf32> to vector<32x512xf32>
    %9 = arith.addf %6, %8 : vector<32x512xf32>
    %10 = math.tanh %9 : vector<32x512xf32>
    %c0_7 = arith.constant 0 : index
    %c0_8 = arith.constant 0 : index
    %11 = vector.load %arg5[%c0_7, %c0_8] : memref<32x32xbf16, #tpu.memory_space<vmem>>, vector<32x32xbf16>
    %12 = arith.truncf %10 : vector<32x512xf32> to vector<32x512xbf16>
    %cst_9 = arith.constant dense<0.000000e+00> : vector<32x512xf32>
    %13 = tpu.matmul %11, %12, %cst_9 {dimension_numbers = #tpu.dot_dimension_numbers<[1], [0], [0], [1], [0, 0, 1, 1], [], []>} : vector<32x32xbf16>, vector<32x512xbf16>, vector<32x512xf32> -> vector<32x512xf32>
    %c0_10 = arith.constant 0 : index
    %c0_11 = arith.constant 0 : index
    %14 = vector.load %arg6[%c0_10, %c0_11] : memref<32x1xf32, #tpu.memory_space<vmem>>, vector<32x1xf32>
    %15 = vector.broadcast %14 : vector<32x1xf32> to vector<32x512xf32>
    %16 = arith.addf %13, %15 : vector<32x512xf32>
    %17 = vector.extract_strided_slice %16 {offsets = [0, 0], sizes = [16, 512], strides = [1, 1]} : vector<32x512xf32> to vector<16x512xf32>
    %18 = vector.extract_strided_slice %16 {offsets = [16, 0], sizes = [16, 512], strides = [1, 1]} : vector<32x512xf32> to vector<16x512xf32>
    %19 = arith.negf %18 : vector<16x512xf32>
    %20 = math.exp %19 : vector<16x512xf32>
    %cst_12 = arith.constant 1.000000e+00 : f32
    %21 = vector.broadcast %cst_12 : f32 to vector<16x512xf32>
    %22 = arith.addf %21, %20 : vector<16x512xf32>
    %23 = arith.divf %21, %22 : vector<16x512xf32>
    %cst_13 = arith.constant 1.000000e+00 : f32
    %24 = vector.broadcast %cst_13 : f32 to vector<16x512xf32>
    %25 = arith.subf %24, %2 : vector<16x512xf32>
    %26 = arith.subf %0, %17 : vector<16x512xf32>
    %27 = arith.mulf %23, %26 : vector<16x512xf32>
    %28 = arith.addf %17, %27 : vector<16x512xf32>
    %29 = arith.mulf %25, %28 : vector<16x512xf32>
    %30 = arith.addf %3, %29 : vector<16x512xf32>
    %c0_14 = arith.constant 0 : index
    %c0_15 = arith.constant 0 : index
    %31 = vector.load %arg7[%c0_14, %c0_15] : memref<16x512xf32, #tpu.memory_space<vmem>>, vector<16x512xf32>
    tpu.vector_store %arg7[%c0_14, %c0_15], %30 {strides = array<i32>} : memref<16x512xf32, #tpu.memory_space<vmem>>, vector<16x512xf32>,
    return
  }
  func.func @transform_0(%arg0: i32) -> (i32, i32) {
    %c0_i32 = arith.constant 0 : i32
    %c0_i32_0 = arith.constant 0 : i32
    return %c0_i32, %arg0 : i32, i32
  }
  func.func @transform_1(%arg0: i32) -> (i32, i32) {
    %c0_i32 = arith.constant 0 : i32
    %c0_i32_0 = arith.constant 0 : i32
    return %c0_i32, %arg0 : i32, i32
  }
  func.func @transform_2(%arg0: i32) -> (i32, i32) {
    %c0_i32 = arith.constant 0 : i32
    %c0_i32_0 = arith.constant 0 : i32
    %c0_i32_1 = arith.constant 0 : i32
    return %c0_i32, %c0_i32_0 : i32, i32
  }
  func.func @transform_3(%arg0: i32) -> (i32, i32) {
    %c0_i32 = arith.constant 0 : i32
    %c0_i32_0 = arith.constant 0 : i32
    %c0_i32_1 = arith.constant 0 : i32
    return %c0_i32, %c0_i32_0 : i32, i32
  }
  func.func @transform_4(%arg0: i32) -> (i32, i32) {
    %c0_i32 = arith.constant 0 : i32
    %c0_i32_0 = arith.constant 0 : i32
    %c0_i32_1 = arith.constant 0 : i32
    return %c0_i32, %c0_i32_0 : i32, i32
  }
  func.func @transform_5(%arg0: i32) -> (i32, i32) {
    %c0_i32 = arith.constant 0 : i32
    %c0_i32_0 = arith.constant 0 : i32
    %c0_i32_1 = arith.constant 0 : i32
    return %c0_i32, %c0_i32_0 : i32, i32
  }
  func.func @transform_6(%arg0: i32) -> (i32, i32) {
    %c0_i32 = arith.constant 0 : i32
    %c0_i32_0 = arith.constant 0 : i32
    return %c0_i32, %arg0 : i32, i32
  }
}

</mosaic_0001>

<llo_original>
// kernel: tpu_custom_call.1
$region0: #{tpu_custom_call.1}
  #allocation0 [shape = 'u32[]', space=smem, size = 0x4, offset = 0x4, fixed_abs, tag = 'smem constant byte address 0x4 - core index']
  #allocation1 [shape = 'u32[144,128]{1,0:T(1,128)}', space=vmem, size = 0x12000, scoped, tag = 'internal scratch']
  %s0 = inlined_call_operand.hbm [shape: f32[16,1024], index: 0, kind: input, shape index: {}]
  %s1 = inlined_call_operand.vmem [shape: bf16[16,1024], index: 1, kind: input, shape index: {}]
  %s2 = inlined_call_operand.vmem [shape: bf16[32,16], index: 2, kind: input, shape index: {}]
  %s3 = inlined_call_operand.vmem [shape: f32[32,1], index: 3, kind: input, shape index: {}]
  %s4 = inlined_call_operand.vmem [shape: bf16[32,32], index: 4, kind: input, shape index: {}]
  %s5 = inlined_call_operand.vmem [shape: f32[32,1], index: 5, kind: input, shape index: {}]
  %s6 = inlined_call_operand.hbm [shape: f32[16,1024], index: 6, kind: output, shape index: {}]
  %s7 = sld [smem:[#allocation0]]
  $region84: #{tpu_custom_call.1} parent=0
    _
  %s9 = ssub.s32 1, %s7
  %s10 = scalar_select 0, %s9, %s7
  $region1: #{tpu_custom_call.1} parent=0
    #allocation2 [shape = 'u8[65536]{0}', space=vmem, size = 0x10000, scoped, tag = 'input window, operand 0']
    #allocation3 [shape = 's32[2]{0}', space=sflag, size = 0x8, scoped, tag = 'scoped memory for tpu_custom_call.1']
    #allocation4 [shape = 's32[2]{0}', space=sflag, size = 0x8, scoped, tag = 'scoped memory for tpu_custom_call.1']
    #allocation5 [shape = 'u8[32768]{0}', space=vmem, size = 0x8000, scoped, tag = 'input window, operand 1']
    #allocation6 [shape = 'u8[65536]{0}', space=vmem, size = 0x10000, scoped, tag = 'output window, operand 0']
    %11 = vsyncpa [#allocation3], 0
    %s12 = scalar_lea.sflag [#allocation3], 1
    %13 = vsyncpa %s12, 0
    %14 = vsyncpa [#allocation4], 0
    %s15 = scalar_lea.sflag [#allocation4], 1
    %16 = vsyncpa %s15, 0
    loop: start=0, step=1, limit=4
    $region2: #{tpu_custom_call.1} parent=1 // loop_pre_header
      _
    $region3: #{tpu_custom_call.1} parent=1 // loop_header
      %s18 = sphi 0, %s22
      %p19 = scmp.ge.s32.totalorder %s18, 4
      %s28 = sphi 0, %s30
      %s31 = sphi 0, %s28
      %s32 = sphi 0, %s31
      %s48 = sphi 0, %s32
      %s54 = sphi 0, %s56
      %s57 = sphi 0, %s54
      %s58 = sphi 0, %s57
      %s74 = sphi 0, %s58
      %s78 = sphi 0, %s78
      %s80 = sphi 0, %s78
      %s81 = sphi 0, %s80
      %s95 = sphi 0, %s81
      %s99 = sphi 0, %s99
      %s101 = sphi 0, %s99
      %s102 = sphi 0, %s101
      %s116 = sphi 0, %s102
      %s120 = sphi 0, %s120
      %s122 = sphi 0, %s120
      %s123 = sphi 0, %s122
      %s137 = sphi 0, %s123
      %s141 = sphi 0, %s141
      %s143 = sphi 0, %s141
      %s144 = sphi 0, %s143
      %s158 = sphi 0, %s144
      %s164 = sphi 0, %s166
      %s167 = sphi 0, %s164
      %s168 = sphi 0, %s167
      %s184 = sphi 0, %s168
    $region4: #{tpu_custom_call.1} parent=1 // loop_header_branch
      %21 = sbr.rel (%p19) target = $region8
    $region5: #{tpu_custom_call.1} parent=1 // loop_body
      %s23 = ssub.s32 %s18, 1
      %s24 = ssub.s32 %s18, 2
      %s25 = sadd.s32 %s18, 1
      %s26 = ssub.s32 %s18, %s25
      %p27 = scmp.eq.s32.totalorder %s26, 0
      %s29 = sadd.s32 %s28, 1
      %s30 = scalar_select %p27, %s28, %s29
      %p33 = pneg %p27
      %p34 = scmp.eq.s32.totalorder %s18, 1
      %p35 = por %p33, %p34
      %p36 = scmp.ne.s32.totalorder %s28, %s31
      %p37 = scmp.eq.s32.totalorder %s18, 0
      %p38 = por %p36, %p37
      %p39 = scmp.ne.s32.totalorder %s28, %s31
      %p40 = scmp.eq.s32.totalorder %s23, 1
      %p41 = por %p39, %p40
      %p42 = scmp.ne.s32.totalorder %s31, %s32
      %p43 = scmp.eq.s32.totalorder %s23, 0
      %p44 = por %p42, %p43
      %p45 = scmp.ne.s32.totalorder %s31, %s32
      %p46 = scmp.eq.s32.totalorder %s24, 1
      %p47 = por %p45, %p46
      %p49 = scmp.ne.s32.totalorder %s32, %s48
      %p50 = scmp.eq.s32.totalorder %s24, 0
      %p51 = por %p49, %p50
      %s52 = ssub.s32 %s18, %s25
      %p53 = scmp.eq.s32.totalorder %s52, 0
      %s55 = sadd.s32 %s54, 1
      %s56 = scalar_select %p53, %s54, %s55
      %p59 = pneg %p53
      %p60 = scmp.eq.s32.totalorder %s18, 1
      %p61 = por %p59, %p60
      %p62 = scmp.ne.s32.totalorder %s54, %s57
      %p63 = scmp.eq.s32.totalorder %s18, 0
      %p64 = por %p62, %p63
      %p65 = scmp.ne.s32.totalorder %s54, %s57
      %p66 = scmp.eq.s32.totalorder %s23, 1
      %p67 = por %p65, %p66
      %p68 = scmp.ne.s32.totalorder %s57, %s58
      %p69 = scmp.eq.s32.totalorder %s23, 0
      %p70 = por %p68, %p69
      %p71 = scmp.ne.s32.totalorder %s57, %s58
      %p72 = scmp.eq.s32.totalorder %s24, 1
      %p73 = por %p71, %p72
      %p75 = scmp.ne.s32.totalorder %s58, %s74
      %p76 = scmp.eq.s32.totalorder %s24, 0
      %p77 = por %p75, %p76
      %s79 = sadd.s32 %s78, 1
      %p82 = scmp.eq.s32.totalorder %s18, 1
      %p83 = scmp.ne.s32.totalorder %s78, %s80
      %p84 = scmp.eq.s32.totalorder %s18, 0
      %p85 = por %p83, %p84
      %p86 = scmp.ne.s32.totalorder %s78, %s80
      %p87 = scmp.eq.s32.totalorder %s23, 1
      %p88 = por %p86, %p87
      %p89 = scmp.ne.s32.totalorder %s80, %s81
      %p90 = scmp.eq.s32.totalorder %s23, 0
      %p91 = por %p89, %p90
      %p92 = scmp.ne.s32.totalorder %s80, %s81
      %p93 = scmp.eq.s32.totalorder %s24, 1
      %p94 = por %p92, %p93
      %p96 = scmp.ne.s32.totalorder %s81, %s95
      %p97 = scmp.eq.s32.totalorder %s24, 0
      %p98 = por %p96, %p97
      %s100 = sadd.s32 %s99, 1
      %p103 = scmp.eq.s32.totalorder %s18, 1
      %p104 = scmp.ne.s32.totalorder %s99, %s101
      %p105 = scmp.eq.s32.totalorder %s18, 0
      %p106 = por %p104, %p105
      %p107 = scmp.ne.s32.totalorder %s99, %s101
      %p108 = scmp.eq.s32.totalorder %s23, 1
      %p109 = por %p107, %p108
      %p110 = scmp.ne.s32.totalorder %s101, %s102
      %p111 = scmp.eq.s32.totalorder %s23, 0
      %p112 = por %p110, %p111
      %p113 = scmp.ne.s32.totalorder %s101, %s102
      %p114 = scmp.eq.s32.totalorder %s24, 1
      %p115 = por %p113, %p114
      %p117 = scmp.ne.s32.totalorder %s102, %s116
      %p118 = scmp.eq.s32.totalorder %s24, 0
      %p119 = por %p117, %p118
      %s121 = sadd.s32 %s120, 1
      %p124 = scmp.eq.s32.totalorder %s18, 1
      %p125 = scmp.ne.s32.totalorder %s120, %s122
      %p126 = scmp.eq.s32.totalorder %s18, 0
      %p127 = por %p125, %p126
      %p128 = scmp.ne.s32.totalorder %s120, %s122
      %p129 = scmp.eq.s32.totalorder %s23, 1
      %p130 = por %p128, %p129
      %p131 = scmp.ne.s32.totalorder %s122, %s123
      %p132 = scmp.eq.s32.totalorder %s23, 0
      %p133 = por %p131, %p132
      %p134 = scmp.ne.s32.totalorder %s122, %s123
      %p135 = scmp.eq.s32.totalorder %s24, 1
      %p136 = por %p134, %p135
      %p138 = scmp.ne.s32.totalorder %s123, %s137
      %p139 = scmp.eq.s32.totalorder %s24, 0
      %p140 = por %p138, %p139
      %s142 = sadd.s32 %s141, 1
      %p145 = scmp.eq.s32.totalorder %s18, 1
      %p146 = scmp.ne.s32.totalorder %s141, %s143
      %p147 = scmp.eq.s32.totalorder %s18, 0
      %p148 = por %p146, %p147
      %p149 = scmp.ne.s32.totalorder %s141, %s143
      %p150 = scmp.eq.s32.totalorder %s23, 1
      %p151 = por %p149, %p150
      %p152 = scmp.ne.s32.totalorder %s143, %s144
      %p153 = scmp.eq.s32.totalorder %s23, 0
      %p154 = por %p152, %p153
      %p155 = scmp.ne.s32.totalorder %s143, %s144
      %p156 = scmp.eq.s32.totalorder %s24, 1
      %p157 = por %p155, %p156
      %p159 = scmp.ne.s32.totalorder %s144, %s158
      %p160 = scmp.eq.s32.totalorder %s24, 0
      %p161 = por %p159, %p160
      %s162 = ssub.s32 %s18, %s25
      %p163 = scmp.eq.s32.totalorder %s162, 0
      %s165 = sadd.s32 %s164, 1
      %s166 = scalar_select %p163, %s164, %s165
      %p169 = pneg %p163
      %p170 = scmp.eq.s32.totalorder %s18, 1
      %p171 = por %p169, %p170
      %p172 = scmp.ne.s32.totalorder %s164, %s167
      %p173 = scmp.eq.s32.totalorder %s18, 0
      %p174 = por %p172, %p173
      %p175 = scmp.ne.s32.totalorder %s164, %s167
      %p176 = scmp.eq.s32.totalorder %s23, 1
      %p177 = por %p175, %p176
      %p178 = scmp.ne.s32.totalorder %s167, %s168
      %p179 = scmp.eq.s32.totalorder %s23, 0
      %p180 = por %p178, %p179
      %p181 = scmp.ne.s32.totalorder %s167, %s168
      %p182 = scmp.eq.s32.totalorder %s24, 1
      %p183 = por %p181, %p182
      %p185 = scmp.ne.s32.totalorder %s168, %s184
      %p186 = scmp.eq.s32.totalorder %s24, 0
      %p187 = por %p185, %p186
      %p188 = scmp.le.s32.totalorder 1, %s18
      %p189 = scmp.lt.s32.totalorder %s18, 3
      %p190 = pnand %p188, %p189
      %p191 = pneg %p190
      // Predicated region
      $region9: #{tpu_custom_call.1} parent=5 // pred_check
        _
      $region10: #{tpu_custom_call.1} parent=5 // pred_check_branch
        %193 = sbr.rel (%p190) target = $region12
      $region11: #{tpu_custom_call.1} parent=5 // pred_region
        %s194 = ssub.s32 %s18, 1
        // Predicated region
        $region13: #{tpu_custom_call.1} parent=11 // pred_check
          %p195 = pneg %p91
        $region14: #{tpu_custom_call.1} parent=11 // pred_check_branch
          %197 = sbr.rel (%p195) target = $region16
        $region15: #{tpu_custom_call.1} parent=11 // pred_region
          _
        $region16: #{tpu_custom_call.1} parent=11 // pred_fallthru
          _
        // Predicated region
        $region17: #{tpu_custom_call.1} parent=11 // pred_check
          %p198 = pneg %p112
        $region18: #{tpu_custom_call.1} parent=11 // pred_check_branch
          %200 = sbr.rel (%p198) target = $region20
        $region19: #{tpu_custom_call.1} parent=11 // pred_region
          _
        $region20: #{tpu_custom_call.1} parent=11 // pred_fallthru
          _
        // Predicated region
        $region21: #{tpu_custom_call.1} parent=11 // pred_check
          %p201 = pneg %p133
        $region22: #{tpu_custom_call.1} parent=11 // pred_check_branch
          %203 = sbr.rel (%p201) target = $region24
        $region23: #{tpu_custom_call.1} parent=11 // pred_region
          _
        $region24: #{tpu_custom_call.1} parent=11 // pred_fallthru
          _
        // Predicated region
        $region25: #{tpu_custom_call.1} parent=11 // pred_check
          %p204 = pneg %p154
        $region26: #{tpu_custom_call.1} parent=11 // pred_check_branch
          %206 = sbr.rel (%p204) target = $region28
        $region27: #{tpu_custom_call.1} parent=11 // pred_region
          _
        $region28: #{tpu_custom_call.1} parent=11 // pred_fallthru
          _
      $region12: #{tpu_custom_call.1} parent=5 // pred_fallthru
        _
      %p207 = scmp.lt.s32.totalorder %s18, 2
      // Predicated region
      $region29: #{tpu_custom_call.1} parent=5 // pred_check
        %p208 = pneg %p207
      $region30: #{tpu_custom_call.1} parent=5 // pred_check_branch
        %210 = sbr.rel (%p208) target = $region32
      $region31: #{tpu_custom_call.1} parent=5 // pred_region
        // Predicated region
        $region33: #{tpu_custom_call.1} parent=31 // pred_check
          %p211 = pneg %p38
        $region34: #{tpu_custom_call.1} parent=31 // pred_check_branch
          %213 = sbr.rel (%p211) target = $region36
        $region35: #{tpu_custom_call.1} parent=31 // pred_region
          %s214 = sand.u32 %s28, 1
          %s215 = scalar_lea.sflag [#allocation3], %s214
          %s216 = sand.u32 %s28, 1
          %s217 = smul.addr %s216, 64
          %s218 = scalar_lea.vmem [#allocation2], %s217
          %s219 = smul.u32 4, %s18
          %s221 = ssub.s32 1024, 1024
          %222 = vsyncadd %s215, %s221
          %s223 = smul.addr %s219, 128
          %s224 = scalar_lea.hbm %s0, %s223
          %s225 = sshll.u32 %s218, 4
          %s226 = int_to_ptr.vmem [resolvable:$true] %s225
          %231 = dma.hbm_to_vmem [thread:$0]  %s224, 1024, %s226, %s215, 1024, 512, 32
        $region36: #{tpu_custom_call.1} parent=31 // pred_fallthru
          _
        // Predicated region
        $region37: #{tpu_custom_call.1} parent=31 // pred_check
          %p232 = pneg %p64
        $region38: #{tpu_custom_call.1} parent=31 // pred_check_branch
          %234 = sbr.rel (%p232) target = $region40
        $region39: #{tpu_custom_call.1} parent=31 // pred_region
          %s235 = sand.u32 %s54, 1
          %s236 = sand.u32 %s54, 1
          %s237 = smul.addr %s236, 32
          %s238 = scalar_lea.vmem [#allocation5], %s237
          %s239 = smul.u32 4, %s18
          %s240 = smul.addr %s239, 4
          %s241 = scalar_lea.vmem %s1, %s240
          // Predicated region
          $region41: #{tpu_custom_call.1} parent=39 // pred_check
            _
          $region42: #{tpu_custom_call.1} parent=39 // pred_check_branch
            %243 = sbr.rel (0) target = $region44
          $region43: #{tpu_custom_call.1} parent=39 // pred_region
            // Predicated region
            $region45: #{tpu_custom_call.1} parent=43 // pred_check
              _
            $region46: #{tpu_custom_call.1} parent=43 // pred_check_branch
              %245 = sbr.rel (0) target = $region48
            $region47: #{tpu_custom_call.1} parent=43 // pred_region
              loop: start=0, step=1, limit=1
              $region49: #{tpu_custom_call.1} parent=47 // loop_pre_header
                _
              $region50: #{tpu_custom_call.1} parent=47 // loop_header
                %s247 = sphi 0, %s251
                %p248 = scmp.ge.s32.totalorder %s247, 1
                %s252 = sphi %s241, %s241
                %s253 = sphi %s238, %s238
              $region51: #{tpu_custom_call.1} parent=47 // loop_header_branch
                %250 = sbr.rel (%p248) target = $region55
              $region52: #{tpu_custom_call.1} parent=47 // loop_body
                %v254 = vld [vmem:[%s252] sm:$0xff]
                %255 = vst [vmem:[%s253] sm:$0xff] %v254
                %v256 = vld [vmem:[%s252 + $0x8] sm:$0xff]
                %257 = vst [vmem:[%s253 + $0x8] sm:$0xff] %v256
                %v258 = vld [vmem:[%s252 + $0x20] sm:$0xff]
                %259 = vst [vmem:[%s253 + $0x10] sm:$0xff] %v258
                %v260 = vld [vmem:[%s252 + $0x28] sm:$0xff]
                %261 = vst [vmem:[%s253 + $0x18] sm:$0xff] %v260
              $region53: #{tpu_custom_call.1} parent=47 // loop_footer
                %s251 = sadd.s32 1, %s247
              $region54: #{tpu_custom_call.1} parent=47 // loop_footer_branch
                %246 = sbr.rel target = $region50
              $region55: #{tpu_custom_call.1} parent=47 // loop_exit
                _
            $region48: #{tpu_custom_call.1} parent=43 // pred_fallthru
              _
            // Predicated region
            $region56: #{tpu_custom_call.1} parent=43 // pred_check
              _
            $region57: #{tpu_custom_call.1} parent=43 // pred_check_branch
              %263 = sbr.rel target = $region59
            $region58: #{tpu_custom_call.1} parent=43 // pred_region
              _
            $region59: #{tpu_custom_call.1} parent=43 // pred_fallthru
              _
          $region44: #{tpu_custom_call.1} parent=39 // pred_fallthru
            _
          %264 = vnop
        $region40: #{tpu_custom_call.1} parent=31 // pred_fallthru
          _
      $region32: #{tpu_custom_call.1} parent=5 // pred_fallthru
        _
      %p265 = scmp.le.s32.totalorder 1, %s18
      %p266 = scmp.lt.s32.totalorder %s18, 3
      %p267 = pnand %p265, %p266
      %p268 = pneg %p267
      // Predicated region
      $region60: #{tpu_custom_call.1} parent=5 // pred_check
        _
      $region61: #{tpu_custom_call.1} parent=5 // pred_check_branch
        %270 = sbr.rel (%p267) target = $region63
      $region62: #{tpu_custom_call.1} parent=5 // pred_region
        %s271 = ssub.s32 %s18, 1
        %s272 = sand.u32 %s31, 1
        %s273 = scalar_lea.sflag [#allocation3], %s272
        %s274 = sand.u32 %s31, 1
        %s275 = smul.addr %s274, 64
        %s276 = scalar_lea.vmem [#allocation2], %s275
        // Predicated region
        $region64: #{tpu_custom_call.1} parent=62 // pred_check
          %p277 = pneg %p44
        $region65: #{tpu_custom_call.1} parent=62 // pred_check_branch
          %279 = sbr.rel (%p277) target = $region67
        $region66: #{tpu_custom_call.1} parent=62 // pred_region
          %280 = dma.done %s273, 1024
        $region67: #{tpu_custom_call.1} parent=62 // pred_fallthru
          _
        %s281 = sand.u32 %s57, 1
        %s282 = sand.u32 %s57, 1
        %s283 = smul.addr %s282, 32
        %s284 = scalar_lea.vmem [#allocation5], %s283
        // Predicated region
        $region68: #{tpu_custom_call.1} parent=62 // pred_check
          %p285 = pneg %p70
        $region69: #{tpu_custom_call.1} parent=62 // pred_check_branch
          %287 = sbr.rel (%p285) target = $region71
        $region70: #{tpu_custom_call.1} parent=62 // pred_region
          _
        $region71: #{tpu_custom_call.1} parent=62 // pred_fallthru
          _
        %s288 = sand.u32 %s31, 1
        %s289 = scalar_lea.sflag [#allocation3], %s288
        %s290 = sand.u32 %s31, 1
        %s291 = smul.addr %s290, 64
        %s292 = scalar_lea.vmem [#allocation2], %s291
        %p293 = pneg %p44
        %p294 = pneg %p41
        %s295 = sand.u32 %s57, 1
        %s296 = sand.u32 %s57, 1
        %s297 = smul.addr %s296, 32
        %s298 = scalar_lea.vmem [#allocation5], %s297
        %p299 = pneg %p70
        %p300 = pneg %p67
        %p301 = pneg %p91
        %p302 = pneg %p88
        %p303 = pneg %p112
        %p304 = pneg %p109
        %p305 = pneg %p133
        %p306 = pneg %p130
        %p307 = pneg %p154
        %p308 = pneg %p151
        %p309 = pneg %p180
        %p310 = pneg %p177
        %s311 = sand.u32 %s167, 1
        %s312 = scalar_lea.sflag [#allocation4], %s311
        %s313 = sand.u32 %s167, 1
        %s314 = smul.addr %s313, 64
        %s315 = scalar_lea.vmem [#allocation6], %s314
        %s316 = smul.u32 4, %s23
        %s317 = smul.u32 4, %s23
        %s318 = smul.u32 4, %s23
        %v320 = vld [vmem:[%s276] sm:$0xff]
        %v321 = vld [vmem:[%s276 + $0x8] sm:$0xff]
        %v322 = vld [vmem:[%s276 + $0x10] sm:$0xff]
        %v323 = vld [vmem:[%s276 + $0x18] sm:$0xff]
        %v324 = vld [vmem:[%s276 + $0x20] sm:$0xff]
        %v325 = vld [vmem:[%s276 + $0x28] sm:$0xff]
        %v326 = vld [vmem:[%s276 + $0x30] sm:$0xff]
        %v327 = vld [vmem:[%s276 + $0x38] sm:$0xff]
        %v328 = vld [vmem:[%s284] sm:$0xff]
        %v329 = vld [vmem:[%s284 + $0x8] sm:$0xff]
        %v330 = vld [vmem:[%s284 + $0x10] sm:$0xff]
        %v331 = vld [vmem:[%s284 + $0x18] sm:$0xff]
        %v332 = vunpack.c.l.bf16 %v328
        %v333 = vunpack.c.h.bf16 %v328
        %v334 = vunpack.c.l.bf16 %v329
        %v335 = vunpack.c.h.bf16 %v329
        %v336 = vunpack.c.l.bf16 %v330
        %v337 = vunpack.c.h.bf16 %v330
        %v338 = vunpack.c.l.bf16 %v331
        %v339 = vunpack.c.h.bf16 %v331
        %v340 = vmul.f32 %v332, %v320
        %v341 = vmul.f32 %v333, %v321
        %v342 = vmul.f32 %v334, %v322
        %v343 = vmul.f32 %v335, %v323
        %v344 = vmul.f32 %v336, %v324
        %v345 = vmul.f32 %v337, %v325
        %v346 = vmul.f32 %v338, %v326
        %v347 = vmul.f32 %v339, %v327
        %v348 = vld [vmem:[%s2] sm:$0xf]
        %v349 = vld [vmem:[%s2 + $0x4] sm:$0xf]
        %v350 = vld [vmem:[%s2 + $0x8] sm:$0xf]
        %v351 = vld [vmem:[%s2 + $0xc] sm:$0xf]
        %v352 = vpack.c.bf16 %v344, %v340
        %v353 = vpack.c.bf16 %v345, %v341
        %v354 = vpack.c.bf16 %v346, %v342
        %v355 = vpack.c.bf16 %v347, %v343
        %v356 = vld [vmem:[%s3] sm:$0xff]
        %v357 = vld [vmem:[%s3 + $0x8] sm:$0xff]
        %v358 = vld [vmem:[%s3 + $0x10] sm:$0xff]
        %v359 = vld [vmem:[%s3 + $0x18] sm:$0xff]
        %361 = vset.pattern.permute.xlu0 0
        %362 = vperm.xlu0 %361, %v356
        %v363 = vpop.permute.xlu0 %362
        %366 = vset.pattern.permute.xlu0 0
        %367 = vperm.xlu0 %366, %v357
        %v368 = vpop.permute.xlu0 %367
        %371 = vset.pattern.permute.xlu0 0
        %372 = vperm.xlu0 %371, %v358
        %v373 = vpop.permute.xlu0 %372
        %376 = vset.pattern.permute.xlu0 0
        %377 = vperm.xlu0 %376, %v359
        %v378 = vpop.permute.xlu0 %377
        %v384 = vunpack.c.l.b16 %v348
        %v385 = vunpack.c.l.b16 %v349
        %v386 = vunpack.c.l.b16 %v350
        %v387 = vunpack.c.l.b16 %v351
        %v388 = vpack.c.b16 %v385, %v384
        %v389 = vpack.c.b16 %v387, %v386
        %vm390 = vcmask 130048
        %v392 = vsel %vm390, %v388, 0
        %v395 = vsel %vm390, %v389, 0
        %397 = vmatprep.subr.bf16.mxu0 0
        %398 = vmatpush1.bf16.msra.mxu0 0
        %399 = vmatprep.subr.bf16.mxu0 0
        %400 = vmatpush1.bf16.msra.mxu0 0
        %401 = vmatprep.subr.bf16.mxu0 0
        %402 = vmatpush1.bf16.msra.mxu0 0
        %403 = vmatprep.subr.bf16.mxu0 0
        %404 = vmatpush1.bf16.msra.mxu0 0
        %405 = vmatprep.subr.bf16.mxu0 0
        %406 = vmatpush1.bf16.msra.mxu0 0
        %407 = vmatprep.subr.bf16.mxu0 0
        %408 = vmatpush1.bf16.msra.mxu0 0
        %409 = vmatprep.subr.bf16.mxu0 0
        %410 = vmatpush1.bf16.msra.mxu0 0
        %411 = vmatprep.subr.bf16.mxu0 %v353
        %412 = vmatpush1.bf16.msra.mxu0 %v352
        %413 = vmatprep.subr.bf16.mxu0 0
        %414 = vmatpush2.bf16.msra.mxu0 0
        %415 = vmatprep.subr.bf16.mxu0 0
        %416 = vmatpush2.bf16.msra.mxu0 0
        %417 = vmatprep.subr.bf16.mxu0 0
        %418 = vmatpush2.bf16.msra.mxu0 0
        %419 = vmatprep.subr.bf16.mxu0 0
        %420 = vmatpush2.bf16.msra.mxu0 0
        %421 = vmatprep.subr.bf16.mxu0 0
        %422 = vmatpush2.bf16.msra.mxu0 0
        %423 = vmatprep.subr.bf16.mxu0 0
        %424 = vmatpush2.bf16.msra.mxu0 0
        %425 = vmatprep.subr.bf16.mxu0 0
        %426 = vmatpush2.bf16.msra.mxu0 0
        %427 = vmatprep.subr.bf16.mxu0 0
        %428 = vmatpush2.bf16.msra.mxu0 0
        %429 = vmatprep.mubr.bf16.mxu0 0
        %430 = vmatmul.mubr.bf16.gmra.mxu0 %v392
        %v431 = vpop.f32.mrf.mxu0
        %v432 = vadd.f32 %v363, %v431
        %v433 = vpop.f32.mrf.mxu0
        %v434 = vadd.f32 %v363, %v433
        %v435 = vpop.f32.mrf.mxu0
        %v436 = vadd.f32 %v368, %v435
        %v437 = vpop.f32.mrf.mxu0
        %v438 = vadd.f32 %v368, %v437
        %439 = vmatprep.mubr.bf16.mxu0 0
        %440 = vmatmul.mubr.bf16.gmra.mxu0 %v395
        %v441 = vpop.f32.mrf.mxu0
        %v442 = vadd.f32 %v373, %v441
        %v443 = vpop.f32.mrf.mxu0
        %v444 = vadd.f32 %v373, %v443
        %v445 = vpop.f32.mrf.mxu0
        %v446 = vadd.f32 %v378, %v445
        %v447 = vpop.f32.mrf.mxu0
        %v448 = vadd.f32 %v378, %v447
        %449 = vdwg.mxu0
        %450 = vmatprep.subr.bf16.mxu0 0
        %451 = vmatpush1.bf16.msra.mxu0 0
        %452 = vmatprep.subr.bf16.mxu0 0
        %453 = vmatpush1.bf16.msra.mxu0 0
        %454 = vmatprep.subr.bf16.mxu0 0
        %455 = vmatpush1.bf16.msra.mxu0 0
        %456 = vmatprep.subr.bf16.mxu0 0
        %457 = vmatpush1.bf16.msra.mxu0 0
        %458 = vmatprep.subr.bf16.mxu0 0
        %459 = vmatpush1.bf16.msra.mxu0 0
        %460 = vmatprep.subr.bf16.mxu0 0
        %461 = vmatpush1.bf16.msra.mxu0 0
        %462 = vmatprep.subr.bf16.mxu0 0
        %463 = vmatpush1.bf16.msra.mxu0 0
        %464 = vmatprep.subr.bf16.mxu0 %v355
        %465 = vmatpush1.bf16.msra.mxu0 %v354
        %466 = vmatprep.subr.bf16.mxu0 0
        %467 = vmatpush2.bf16.msra.mxu0 0
        %468 = vmatprep.subr.bf16.mxu0 0
        %469 = vmatpush2.bf16.msra.mxu0 0
        %470 = vmatprep.subr.bf16.mxu0 0
        %471 = vmatpush2.bf16.msra.mxu0 0
        %472 = vmatprep.subr.bf16.mxu0 0
        %473 = vmatpush2.bf16.msra.mxu0 0
        %474 = vmatprep.subr.bf16.mxu0 0
        %475 = vmatpush2.bf16.msra.mxu0 0
        %476 = vmatprep.subr.bf16.mxu0 0
        %477 = vmatpush2.bf16.msra.mxu0 0
        %478 = vmatprep.subr.bf16.mxu0 0
        %479 = vmatpush2.bf16.msra.mxu0 0
        %480 = vmatprep.subr.bf16.mxu0 0
        %481 = vmatpush2.bf16.msra.mxu0 0
        %482 = vmatprep.mubr.bf16.mxu0 0
        %483 = vmatmul.mubr.bf16.gmra.mxu0 %v392
        %v484 = vpop.f32.mrf.mxu0
        %v485 = vadd.f32 %v363, %v484
        %v486 = vpop.f32.mrf.mxu0
        %v487 = vadd.f32 %v363, %v486
        %v488 = vpop.f32.mrf.mxu0
        %v489 = vadd.f32 %v368, %v488
        %v490 = vpop.f32.mrf.mxu0
        %v491 = vadd.f32 %v368, %v490
        %492 = vmatprep.mubr.bf16.mxu0 0
        %493 = vmatmul.mubr.bf16.gmra.mxu0 %v395
        %v494 = vpop.f32.mrf.mxu0
        %v495 = vadd.f32 %v373, %v494
        %v496 = vpop.f32.mrf.mxu0
        %v497 = vadd.f32 %v373, %v496
        %v498 = vpop.f32.mrf.mxu0
        %v499 = vadd.f32 %v378, %v498
        %v500 = vpop.f32.mrf.mxu0
        %v501 = vadd.f32 %v378, %v500
        %502 = vdwg.mxu0
        %v503 = vtanh.pop %v432
        %v504 = vtanh.pop %v434
        %v505 = vtanh.pop %v485
        %v506 = vtanh.pop %v487
        %v507 = vtanh.pop %v436
        %v508 = vtanh.pop %v438
        %v509 = vtanh.pop %v489
        %v510 = vtanh.pop %v491
        %v511 = vtanh.pop %v442
        %v512 = vtanh.pop %v444
        %v513 = vtanh.pop %v495
        %v514 = vtanh.pop %v497
        %v515 = vtanh.pop %v446
        %v516 = vtanh.pop %v448
        %v517 = vtanh.pop %v499
        %v518 = vtanh.pop %v501
        %v519 = vld [vmem:[%s4] sm:$0xf]
        %v520 = vld [vmem:[%s4 + $0x4] sm:$0xf]
        %v521 = vld [vmem:[%s4 + $0x8] sm:$0xf]
        %v522 = vld [vmem:[%s4 + $0xc] sm:$0xf]
        %v523 = vpack.c.bf16 %v507, %v503
        %v524 = vpack.c.bf16 %v508, %v504
        %v525 = vpack.c.bf16 %v509, %v505
        %v526 = vpack.c.bf16 %v510, %v506
        %v527 = vpack.c.bf16 %v515, %v511
        %v528 = vpack.c.bf16 %v516, %v512
        %v529 = vpack.c.bf16 %v517, %v513
        %v530 = vpack.c.bf16 %v518, %v514
        %v531 = vld [vmem:[%s5] sm:$0xff]
        %v532 = vld [vmem:[%s5 + $0x8] sm:$0xff]
        %v533 = vld [vmem:[%s5 + $0x10] sm:$0xff]
        %v534 = vld [vmem:[%s5 + $0x18] sm:$0xff]
        %536 = vset.pattern.permute.xlu0 0
        %537 = vperm.xlu0 %536, %v531
        %v538 = vpop.permute.xlu0 %537
        %541 = vset.pattern.permute.xlu0 0
        %542 = vperm.xlu0 %541, %v532
        %v543 = vpop.permute.xlu0 %542
        %546 = vset.pattern.permute.xlu0 0
        %547 = vperm.xlu0 %546, %v533
        %v548 = vpop.permute.xlu0 %547
        %551 = vset.pattern.permute.xlu0 0
        %552 = vperm.xlu0 %551, %v534
        %v553 = vpop.permute.xlu0 %552
        %v559 = vunpack.c.l.b16 %v519
        %v560 = vunpack.c.l.b16 %v520
        %v561 = vunpack.c.l.b16 %v521
        %v562 = vunpack.c.l.b16 %v522
        %v563 = vpack.c.b16 %v560, %v559
        %v564 = vpack.c.b16 %v562, %v561
        %vm565 = vcmask 261120
        %v567 = vsel %vm565, %v563, 0
        %v570 = vsel %vm565, %v564, 0
        %572 = vmatprep.subr.bf16.mxu0 0
        %573 = vmatpush1.bf16.msra.mxu0 0
        %574 = vmatprep.subr.bf16.mxu0 0
        %575 = vmatpush1.bf16.msra.mxu0 0
        %576 = vmatprep.subr.bf16.mxu0 0
        %577 = vmatpush1.bf16.msra.mxu0 0
        %578 = vmatprep.subr.bf16.mxu0 0
        %579 = vmatpush1.bf16.msra.mxu0 0
        %580 = vmatprep.subr.bf16.mxu0 0
        %581 = vmatpush1.bf16.msra.mxu0 0
        %582 = vmatprep.subr.bf16.mxu0 0
        %583 = vmatpush1.bf16.msra.mxu0 0
        %584 = vmatprep.subr.bf16.mxu0 %v528
        %585 = vmatpush1.bf16.msra.mxu0 %v527
        %586 = vmatprep.subr.bf16.mxu0 %v524
        %587 = vmatpush1.bf16.msra.mxu0 %v523
        %588 = vmatprep.subr.bf16.mxu0 0
        %589 = vmatpush2.bf16.msra.mxu0 0
        %590 = vmatprep.subr.bf16.mxu0 0
        %591 = vmatpush2.bf16.msra.mxu0 0
        %592 = vmatprep.subr.bf16.mxu0 0
        %593 = vmatpush2.bf16.msra.mxu0 0
        %594 = vmatprep.subr.bf16.mxu0 0
        %595 = vmatpush2.bf16.msra.mxu0 0
        %596 = vmatprep.subr.bf16.mxu0 0
        %597 = vmatpush2.bf16.msra.mxu0 0
        %598 = vmatprep.subr.bf16.mxu0 0
        %599 = vmatpush2.bf16.msra.mxu0 0
        %600 = vmatprep.subr.bf16.mxu0 0
        %601 = vmatpush2.bf16.msra.mxu0 0
        %602 = vmatprep.subr.bf16.mxu0 0
        %603 = vmatpush2.bf16.msra.mxu0 0
        %604 = vmatprep.mubr.bf16.mxu0 0
        %605 = vmatmul.mubr.bf16.gmra.mxu0 %v567
        %v606 = vpop.f32.mrf.mxu0
        %v607 = vadd.f32 %v538, %v606
        %v608 = vpop.f32.mrf.mxu0
        %v609 = vadd.f32 %v538, %v608
        %v610 = vpop.f32.mrf.mxu0
        %v611 = vadd.f32 %v543, %v610
        %v612 = vpop.f32.mrf.mxu0
        %v613 = vadd.f32 %v543, %v612
        %614 = vmatprep.mubr.bf16.mxu0 0
        %615 = vmatmul.mubr.bf16.gmra.mxu0 %v570
        %v616 = vpop.f32.mrf.mxu0
        %v617 = vadd.f32 %v548, %v616
        %v618 = vpop.f32.mrf.mxu0
        %v619 = vadd.f32 %v548, %v618
        %v620 = vpop.f32.mrf.mxu0
        %v621 = vadd.f32 %v553, %v620
        %v622 = vpop.f32.mrf.mxu0
        %v623 = vadd.f32 %v553, %v622
        %624 = vdwg.mxu0
        %625 = vmatprep.subr.bf16.mxu0 0
        %626 = vmatpush1.bf16.msra.mxu0 0
        %627 = vmatprep.subr.bf16.mxu0 0
        %628 = vmatpush1.bf16.msra.mxu0 0
        %629 = vmatprep.subr.bf16.mxu0 0
        %630 = vmatpush1.bf16.msra.mxu0 0
        %631 = vmatprep.subr.bf16.mxu0 0
        %632 = vmatpush1.bf16.msra.mxu0 0
        %633 = vmatprep.subr.bf16.mxu0 0
        %634 = vmatpush1.bf16.msra.mxu0 0
        %635 = vmatprep.subr.bf16.mxu0 0
        %636 = vmatpush1.bf16.msra.mxu0 0
        %637 = vmatprep.subr.bf16.mxu0 %v530
        %638 = vmatpush1.bf16.msra.mxu0 %v529
        %639 = vmatprep.subr.bf16.mxu0 %v526
        %640 = vmatpush1.bf16.msra.mxu0 %v525
        %641 = vmatprep.subr.bf16.mxu0 0
        %642 = vmatpush2.bf16.msra.mxu0 0
        %643 = vmatprep.subr.bf16.mxu0 0
        %644 = vmatpush2.bf16.msra.mxu0 0
        %645 = vmatprep.subr.bf16.mxu0 0
        %646 = vmatpush2.bf16.msra.mxu0 0
        %647 = vmatprep.subr.bf16.mxu0 0
        %648 = vmatpush2.bf16.msra.mxu0 0
        %649 = vmatprep.subr.bf16.mxu0 0
        %650 = vmatpush2.bf16.msra.mxu0 0
        %651 = vmatprep.subr.bf16.mxu0 0
        %652 = vmatpush2.bf16.msra.mxu0 0
        %653 = vmatprep.subr.bf16.mxu0 0
        %654 = vmatpush2.bf16.msra.mxu0 0
        %655 = vmatprep.subr.bf16.mxu0 0
        %656 = vmatpush2.bf16.msra.mxu0 0
        %657 = vmatprep.mubr.bf16.mxu0 0
        %658 = vmatmul.mubr.bf16.gmra.mxu0 %v567
        %v659 = vpop.f32.mrf.mxu0
        %v660 = vadd.f32 %v538, %v659
        %v661 = vpop.f32.mrf.mxu0
        %v662 = vadd.f32 %v538, %v661
        %v663 = vpop.f32.mrf.mxu0
        %v664 = vadd.f32 %v543, %v663
        %v665 = vpop.f32.mrf.mxu0
        %v666 = vadd.f32 %v543, %v665
        %667 = vmatprep.mubr.bf16.mxu0 0
        %668 = vmatmul.mubr.bf16.gmra.mxu0 %v570
        %v669 = vpop.f32.mrf.mxu0
        %v670 = vadd.f32 %v548, %v669
        %v671 = vpop.f32.mrf.mxu0
        %v672 = vadd.f32 %v548, %v671
        %v673 = vpop.f32.mrf.mxu0
        %v674 = vadd.f32 %v553, %v673
        %v675 = vpop.f32.mrf.mxu0
        %v676 = vadd.f32 %v553, %v675
        %677 = vdwg.mxu0
        %v678 = vxor.u32 %v617, 2147483648
        %v679 = vxor.u32 %v619, 2147483648
        %v680 = vxor.u32 %v670, 2147483648
        %v681 = vxor.u32 %v672, 2147483648
        %v682 = vxor.u32 %v621, 2147483648
        %v683 = vxor.u32 %v623, 2147483648
        %v684 = vxor.u32 %v674, 2147483648
        %v685 = vxor.u32 %v676, 2147483648
        %v686 = vmul.f32 %v678, 1.442695
        %v687 = vpow.pop %v686
        %v688 = vmul.f32 %v679, 1.442695
        %v689 = vpow.pop %v688
        %v690 = vmul.f32 %v680, 1.442695
        %v691 = vpow.pop %v690
        %v692 = vmul.f32 %v681, 1.442695
        %v693 = vpow.pop %v692
        %v694 = vmul.f32 %v682, 1.442695
        %v695 = vpow.pop %v694
        %v696 = vmul.f32 %v683, 1.442695
        %v697 = vpow.pop %v696
        %v698 = vmul.f32 %v684, 1.442695
        %v699 = vpow.pop %v698
        %v700 = vmul.f32 %v685, 1.442695
        %v701 = vpow.pop %v700
        %v702 = vadd.f32 %v687, 1.0
        %v703 = vadd.f32 %v689, 1.0
        %v704 = vadd.f32 %v691, 1.0
        %v705 = vadd.f32 %v693, 1.0
        %v706 = vadd.f32 %v695, 1.0
        %v707 = vadd.f32 %v697, 1.0
        %v708 = vadd.f32 %v699, 1.0
        %v709 = vadd.f32 %v701, 1.0
        %v710 = vrcp.pop %v702
        %v711 = vmul.f32 1.0, %v710
        %v712 = vrcp.pop %v703
        %v713 = vmul.f32 1.0, %v712
        %v714 = vrcp.pop %v704
        %v715 = vmul.f32 1.0, %v714
        %v716 = vrcp.pop %v705
        %v717 = vmul.f32 1.0, %v716
        %v718 = vrcp.pop %v706
        %v719 = vmul.f32 1.0, %v718
        %v720 = vrcp.pop %v707
        %v721 = vmul.f32 1.0, %v720
        %v722 = vrcp.pop %v708
        %v723 = vmul.f32 1.0, %v722
        %v724 = vrcp.pop %v709
        %v725 = vmul.f32 1.0, %v724
        %v726 = vsub.f32 1.0, %v332
        %v727 = vsub.f32 1.0, %v333
        %v728 = vsub.f32 1.0, %v334
        %v729 = vsub.f32 1.0, %v335
        %v730 = vsub.f32 1.0, %v336
        %v731 = vsub.f32 1.0, %v337
        %v732 = vsub.f32 1.0, %v338
        %v733 = vsub.f32 1.0, %v339
        %v734 = vsub.f32 %v320, %v607
        %v735 = vsub.f32 %v321, %v609
        %v736 = vsub.f32 %v322, %v660
        %v737 = vsub.f32 %v323, %v662
        %v738 = vsub.f32 %v324, %v611
        %v739 = vsub.f32 %v325, %v613
        %v740 = vsub.f32 %v326, %v664
        %v741 = vsub.f32 %v327, %v666
        %v742 = vmul.f32 %v711, %v734
        %v743 = vmul.f32 %v713, %v735
        %v744 = vmul.f32 %v715, %v736
        %v745 = vmul.f32 %v717, %v737
        %v746 = vmul.f32 %v719, %v738
        %v747 = vmul.f32 %v721, %v739
        %v748 = vmul.f32 %v723, %v740
        %v749 = vmul.f32 %v725, %v741
        %v750 = vadd.f32 %v607, %v742
        %v751 = vadd.f32 %v609, %v743
        %v752 = vadd.f32 %v660, %v744
        %v753 = vadd.f32 %v662, %v745
        %v754 = vadd.f32 %v611, %v746
        %v755 = vadd.f32 %v613, %v747
        %v756 = vadd.f32 %v664, %v748
        %v757 = vadd.f32 %v666, %v749
        %v758 = vmul.f32 %v726, %v750
        %v759 = vmul.f32 %v727, %v751
        %v760 = vmul.f32 %v728, %v752
        %v761 = vmul.f32 %v729, %v753
        %v762 = vmul.f32 %v730, %v754
        %v763 = vmul.f32 %v731, %v755
        %v764 = vmul.f32 %v732, %v756
        %v765 = vmul.f32 %v733, %v757
        %v766 = vadd.f32 %v340, %v758
        %v767 = vadd.f32 %v341, %v759
        %v768 = vadd.f32 %v342, %v760
        %v769 = vadd.f32 %v343, %v761
        %v770 = vadd.f32 %v344, %v762
        %v771 = vadd.f32 %v345, %v763
        %v772 = vadd.f32 %v346, %v764
        %v773 = vadd.f32 %v347, %v765
        %774 = vst [vmem:[%s315] sm:$0xff] %v766
        %775 = vst [vmem:[%s315 + $0x8] sm:$0xff] %v767
        %776 = vst [vmem:[%s315 + $0x10] sm:$0xff] %v768
        %777 = vst [vmem:[%s315 + $0x18] sm:$0xff] %v769
        %778 = vst [vmem:[%s315 + $0x20] sm:$0xff] %v770
        %779 = vst [vmem:[%s315 + $0x28] sm:$0xff] %v771
        %780 = vst [vmem:[%s315 + $0x30] sm:$0xff] %v772
        %781 = vst [vmem:[%s315 + $0x38] sm:$0xff] %v773
        %s782 = sand.u32 %s167, 1
        %s783 = scalar_lea.sflag [#allocation4], %s782
        %s784 = sand.u32 %s167, 1
        %s785 = smul.addr %s784, 64
        %s786 = scalar_lea.vmem [#allocation6], %s785
        // Predicated region
        $region72: #{tpu_custom_call.1} parent=62 // pred_check
          %p787 = pneg %p177
        $region73: #{tpu_custom_call.1} parent=62 // pred_check_branch
          %789 = sbr.rel (%p787) target = $region75
        $region74: #{tpu_custom_call.1} parent=62 // pred_region
          %s790 = smul.u32 4, %s23
          %s792 = ssub.s32 1024, 1024
          %793 = vsyncadd %s783, %s792
          %s794 = smul.addr %s790, 128
          %s795 = scalar_lea.hbm %s6, %s794
          %s796 = sshll.u32 %s786, 4
          %s797 = int_to_ptr.vmem [resolvable:$true] %s796
          %802 = dma.vmem_to_hbm [thread:$0]  %s797, 1024, %s795, %s783, 512, 1024, 32
        $region75: #{tpu_custom_call.1} parent=62 // pred_fallthru
          _
      $region63: #{tpu_custom_call.1} parent=5 // pred_fallthru
        _
      %p803 = scmp.le.s32.totalorder 2, %s18
      // Predicated region
      $region76: #{tpu_custom_call.1} parent=5 // pred_check
        %p804 = pneg %p803
      $region77: #{tpu_custom_call.1} parent=5 // pred_check_branch
        %806 = sbr.rel (%p804) target = $region79
      $region78: #{tpu_custom_call.1} parent=5 // pred_region
        %s807 = ssub.s32 %s18, 2
        // Predicated region
        $region80: #{tpu_custom_call.1} parent=78 // pred_check
          %p808 = pneg %p183
        $region81: #{tpu_custom_call.1} parent=78 // pred_check_branch
          %810 = sbr.rel (%p808) target = $region83
        $region82: #{tpu_custom_call.1} parent=78 // pred_region
          %s811 = sand.u32 %s168, 1
          %s812 = scalar_lea.sflag [#allocation4], %s811
          %s813 = sand.u32 %s168, 1
          %s814 = smul.addr %s813, 64
          %s815 = scalar_lea.vmem [#allocation6], %s814
          %816 = dma.done %s812, 1024
        $region83: #{tpu_custom_call.1} parent=78 // pred_fallthru
          _
      $region79: #{tpu_custom_call.1} parent=5 // pred_fallthru
        _
    $region6: #{tpu_custom_call.1} parent=1 // loop_footer
      %s22 = sadd.s32 1, %s18
    $region7: #{tpu_custom_call.1} parent=1 // loop_footer_branch
      %17 = sbr.rel target = $region3
    $region8: #{tpu_custom_call.1} parent=1 // loop_exit
      _
    %817 = vsyncpa [#allocation3], 1
    %s818 = scalar_lea.sflag [#allocation3], 1
    %819 = vsyncpa %s818, 1
    %820 = vsyncpa [#allocation4], 1
    %s821 = scalar_lea.sflag [#allocation4], 1
    %822 = vsyncpa %s821, 1

</llo_original>
